<compile_context>
chip_gen: v5e
topology: v5e:2x2
jax: 0.10.0
libtpu: 0.0.40
codegen_flags: <defaults>
</compile_context>

<pallas_src>
import functools

import jax
import jax.numpy as jnp
from jax import lax
from jax.experimental import pallas as pl
from jax.experimental.pallas import tpu as pltpu


# ---------------------------------------------------------------------------
# Fused Pallas kernel: all GCN layers + masked cross-entropy loss
# ---------------------------------------------------------------------------

def _fused_gcn_loss_kernel(a_ref, x_ref, w_ref, b_ref, onehot_ref, loss_ref,
                           *, num_layers, num_labels):
    """loss = mean_{valid}( -log_softmax(GCN(x))[i, y[i]] )

    a_ref      : [Np, Np]    bf16   normalized dense adjacency (zero-padded)
    x_ref      : [Np, Fp]    bf16   node features (zero-padded)
    w_ref      : [L, Fp, Fp] bf16   stacked, zero-padded layer weights
    b_ref      : [L, 1, Fp]  f32    stacked, zero-padded biases
    onehot_ref : [Np, Fp]    f32    one_hot(y) * (train_mask & y!=-1), padded
    loss_ref   : [1, 128]    f32    scalar loss broadcast across lanes
    """
    a = a_ref[...]                                        # [Np, Np] bf16
    h = x_ref[...]                                        # [Np, Fp] bf16

    logits = None
    for li in range(num_layers):                          # statically unrolled
        w = w_ref[li]                                     # [Fp, Fp] bf16
        b = b_ref[li]                                     # [1, Fp]  f32
        xw = jnp.dot(h, w, preferred_element_type=jnp.float32)          # MXU
        agg = jnp.dot(a, xw.astype(jnp.bfloat16),
                      preferred_element_type=jnp.float32)               # MXU
        out = agg + b                                     # f32 elementwise
        if li < num_layers - 1:
            h = jnp.maximum(out, 0.0).astype(jnp.bfloat16)
        else:
            logits = out                                  # [Np, Fp] f32

    # Padded class columns must not perturb the softmax: push them to -1e30
    # (finite, so 0 * logp stays 0 for padded / invalid rows).
    col = lax.broadcasted_iota(jnp.int32, logits.shape, 1)
    logits = jnp.where(col < num_labels, logits, jnp.float32(-1e30))

    m = jnp.max(logits, axis=-1, keepdims=True)
    lse = jnp.log(jnp.sum(jnp.exp(logits - m), axis=-1, keepdims=True)) + m
    logp = logits - lse                                   # [Np, Fp] f32

    onehot = onehot_ref[...]                              # [Np, Fp] f32
    loss_sum = -jnp.sum(onehot * logp)
    cnt = jnp.sum(onehot)
    # TODO(synk): torch nll_loss(mean) returns NaN when no valid targets;
    #             here we guard with max(cnt, 1) -> 0.0 instead.
    loss = loss_sum / jnp.maximum(cnt, 1.0)

    loss_ref[...] = jnp.zeros_like(loss_ref) + loss       # lane-dense store


# ---------------------------------------------------------------------------
# Plain-JAX glue: dense normalized adjacency, padding, parameter init
# ---------------------------------------------------------------------------

def _round_up(v, m):
    return (v + m - 1) // m * m


def build_normalized_adjacency(edge_index, num_nodes, edge_weight=None):
    """A_hat = D^{-1/2} (A + I) D^{-1/2}, densified from edge_index [2, E]."""
    src, dst = edge_index[0], edge_index[1]
    if edge_weight is None:
        edge_weight = jnp.ones(src.shape[0], dtype=jnp.float32)
    adj = jnp.zeros((num_nodes, num_nodes), dtype=jnp.float32)
    adj = adj.at[dst, src].add(edge_weight)
    adj = adj + jnp.eye(num_nodes, dtype=jnp.float32)      # self-loops
    deg = jnp.sum(adj, axis=1)
    d_inv_sqrt = jnp.where(deg > 0, 1.0 / jnp.sqrt(deg), 0.0)
    return d_inv_sqrt[:, None] * adj * d_inv_sqrt[None, :]


def init_gcn_params(key, in_channels, hidden_channels, out_channels, num_layers):
    dims = [in_channels] + [hidden_channels] * (num_layers - 1) + [out_channels]
    params = []
    for i in range(num_layers):
        key, wk = jax.random.split(key)
        scale = jnp.sqrt(2.0 / (dims[i] + dims[i + 1]))
        w = scale * jax.random.normal(wk, (dims[i], dims[i + 1]), dtype=jnp.float32)
        b = jnp.zeros((1, dims[i + 1]), dtype=jnp.float32)
        params.append((w, b))
    return params


def model_forward(x, edge_index, y, train_mask, params, edge_weight=None):
    """Reproduces Model.forward: GCN -> masked NLL(log_softmax) loss."""
    n, f_in = x.shape
    num_layers = len(params)
    num_labels = params[-1][0].shape[1]

    # Lane-dense feature/class dim, sublane/bf16-aligned node dim.
    f_pad = max(128, _round_up(max([f_in] + [w.shape[1] for w, _ in params]), 128))
    n_pad = _round_up(n, 16)

    a_hat = build_normalized_adjacency(edge_index, n, edge_weight)
    a_pad = (jnp.zeros((n_pad, n_pad), jnp.float32)
             .at[:n, :n].set(a_hat).astype(jnp.bfloat16))
    x_pad = (jnp.zeros((n_pad, f_pad), jnp.float32)
             .at[:n, :f_in].set(x).astype(jnp.bfloat16))

    w_stack = jnp.stack([
        jnp.zeros((f_pad, f_pad), jnp.float32).at[:w.shape[0], :w.shape[1]].set(w)
        for w, _ in params]).astype(jnp.bfloat16)                 # [L, Fp, Fp]
    b_stack = jnp.stack([
        jnp.zeros((1, f_pad), jnp.float32).at[:, :b.shape[1]].set(b)
        for _, b in params])                                      # [L, 1, Fp]

    # Fold targets + mask into one lane-dense "valid one-hot" operand.
    valid = (train_mask & (y != -1)).astype(jnp.float32)          # [N]
    onehot = jax.nn.one_hot(jnp.clip(y, 0, num_labels - 1), f_pad,
                            dtype=jnp.float32) * valid[:, None]   # [N, Fp]
    onehot_pad = jnp.zeros((n_pad, f_pad), jnp.float32).at[:n].set(onehot)

    kernel = functools.partial(_fused_gcn_loss_kernel,
                               num_layers=num_layers, num_labels=num_labels)
    vmem = pl.BlockSpec(memory_space=pltpu.MemorySpace.VMEM)
    out = pl.pallas_call(
        kernel,
        out_shape=jax.ShapeDtypeStruct((1, 128), jnp.float32),
        in_specs=[vmem, vmem, vmem, vmem, vmem],
        out_specs=vmem,
    )(a_pad, x_pad, w_stack, b_stack, onehot_pad)
    return out[0, 0]


# ---------------------------------------------------------------------------
# Main
# ---------------------------------------------------------------------------

if __name__ == "__main__":
    N = 16            # nodes
    FEATURE_DIM = 32  # in_channels
    HIDDEN = 32       # hidden_channels
    NUM_LABELS = 8    # out_channels
    NUM_LAYERS = 2
    E = 48            # number of edges

    key = jax.random.PRNGKey(0)
    kx, ke, ky, km, kp = jax.random.split(key, 5)

    x = jax.random.normal(kx, (N, FEATURE_DIM), dtype=jnp.float32)
    edge_index = jax.random.randint(ke, (2, E), 0, N, dtype=jnp.int32)
    y = jax.random.randint(ky, (N,), -1, NUM_LABELS, dtype=jnp.int32)  # -1 ignored
    train_mask = jax.random.bernoulli(km, 0.6, (N,))

    params = init_gcn_params(kp, FEATURE_DIM, HIDDEN, NUM_LABELS, NUM_LAYERS)

    loss = model_forward(x, edge_index, y, train_mask, params)
    jax.block_until_ready(loss)

    # Pure-f32 JAX reference; kernel uses bf16 MXU operands (f32 accumulate),
    # so allow a modest tolerance.
    a_hat = build_normalized_adjacency(edge_index, N)
    h_ref = x
    for li, (w, b) in enumerate(params):
        h_ref = a_hat @ (h_ref @ w) + b
        if li < NUM_LAYERS - 1:
            h_ref = jnp.maximum(h_ref, 0.0)
    logp = jax.nn.log_softmax(h_ref, axis=1)
    valid = train_mask & (y != -1)
    y_safe = jnp.maximum(y, 0)
    per_node = -jnp.take_along_axis(logp, y_safe[:, None], axis=1)[:, 0]
    ref_loss = jnp.sum(per_node * valid) / jnp.maximum(jnp.sum(valid), 1)
    assert jnp.allclose(loss, ref_loss, atol=5e-2, rtol=5e-2), (loss, ref_loss)

    print("KERNEL_OK")
</pallas_src>

<mosaic_0001>
module attributes {stable_mosaic.version = 11 : i64} {
  func.func @_fused_gcn_loss_kernel(%arg0: memref<16x16xbf16, #tpu.memory_space<vmem>>, %arg1: memref<16x128xbf16, #tpu.memory_space<vmem>>, %arg2: memref<2x128x128xbf16, #tpu.memory_space<vmem>>, %arg3: memref<2x1x128xf32, #tpu.memory_space<vmem>>, %arg4: memref<16x128xf32, #tpu.memory_space<vmem>>, %arg5: memref<1x128xf32, #tpu.memory_space<vmem>>) attributes {dimension_semantics = [], scalar_prefetch = 0 : i64, scratch_operands = 0 : i64, tpu.core_type = #tpu.core_type<tc>} {
    %c0 = arith.constant 0 : index
    %c0_0 = arith.constant 0 : index
    %0 = vector.load %arg0[%c0, %c0_0] : memref<16x16xbf16, #tpu.memory_space<vmem>>, vector<16x16xbf16>
    %c0_1 = arith.constant 0 : index
    %c0_2 = arith.constant 0 : index
    %1 = vector.load %arg1[%c0_1, %c0_2] : memref<16x128xbf16, #tpu.memory_space<vmem>>, vector<16x128xbf16>
    %c0_3 = arith.constant 0 : index
    %c0_4 = arith.constant 0 : index
    %c0_5 = arith.constant 0 : index
    %2 = vector.load %arg2[%c0_3, %c0_4, %c0_5] : memref<2x128x128xbf16, #tpu.memory_space<vmem>>, vector<1x128x128xbf16>
    %3 = vector.shape_cast %2 : vector<1x128x128xbf16> to vector<128x128xbf16>
    %c0_6 = arith.constant 0 : index
    %c0_7 = arith.constant 0 : index
    %c0_8 = arith.constant 0 : index
    %4 = vector.load %arg3[%c0_6, %c0_7, %c0_8] : memref<2x1x128xf32, #tpu.memory_space<vmem>>, vector<1x1x128xf32>
    %5 = vector.shape_cast %4 : vector<1x1x128xf32> to vector<1x128xf32>
    %cst = arith.constant dense<0.000000e+00> : vector<16x128xf32>
    %6 = tpu.matmul %1, %3, %cst {dimension_numbers = #tpu.dot_dimension_numbers<[1], [0], [0], [1], [0, 0, 1, 1], [], []>} : vector<16x128xbf16>, vector<128x128xbf16>, vector<16x128xf32> -> vector<16x128xf32>
    %7 = arith.truncf %6 : vector<16x128xf32> to vector<16x128xbf16>
    %cst_9 = arith.constant dense<0.000000e+00> : vector<16x128xf32>
    %8 = tpu.matmul %0, %7, %cst_9 {dimension_numbers = #tpu.dot_dimension_numbers<[1], [0], [0], [1], [0, 0, 1, 1], [], []>} : vector<16x16xbf16>, vector<16x128xbf16>, vector<16x128xf32> -> vector<16x128xf32>
    %9 = vector.broadcast %5 : vector<1x128xf32> to vector<16x128xf32>
    %10 = arith.addf %8, %9 : vector<16x128xf32>
    %cst_10 = arith.constant 0.000000e+00 : f32
    %11 = vector.broadcast %cst_10 : f32 to vector<16x128xf32>
    %12 = arith.maximumf %10, %11 : vector<16x128xf32>
    %13 = arith.truncf %12 : vector<16x128xf32> to vector<16x128xbf16>
    %c1 = arith.constant 1 : index
    %c0_11 = arith.constant 0 : index
    %c0_12 = arith.constant 0 : index
    %14 = vector.load %arg2[%c1, %c0_11, %c0_12] : memref<2x128x128xbf16, #tpu.memory_space<vmem>>, vector<1x128x128xbf16>
    %15 = vector.shape_cast %14 : vector<1x128x128xbf16> to vector<128x128xbf16>
    %c1_13 = arith.constant 1 : index
    %c0_14 = arith.constant 0 : index
    %c0_15 = arith.constant 0 : index
    %16 = vector.load %arg3[%c1_13, %c0_14, %c0_15] : memref<2x1x128xf32, #tpu.memory_space<vmem>>, vector<1x1x128xf32>
    %17 = vector.shape_cast %16 : vector<1x1x128xf32> to vector<1x128xf32>
    %cst_16 = arith.constant dense<0.000000e+00> : vector<16x128xf32>
    %18 = tpu.matmul %13, %15, %cst_16 {dimension_numbers = #tpu.dot_dimension_numbers<[1], [0], [0], [1], [0, 0, 1, 1], [], []>} : vector<16x128xbf16>, vector<128x128xbf16>, vector<16x128xf32> -> vector<16x128xf32>
    %19 = arith.truncf %18 : vector<16x128xf32> to vector<16x128xbf16>
    %cst_17 = arith.constant dense<0.000000e+00> : vector<16x128xf32>
    %20 = tpu.matmul %0, %19, %cst_17 {dimension_numbers = #tpu.dot_dimension_numbers<[1], [0], [0], [1], [0, 0, 1, 1], [], []>} : vector<16x16xbf16>, vector<16x128xbf16>, vector<16x128xf32> -> vector<16x128xf32>
    %21 = vector.broadcast %17 : vector<1x128xf32> to vector<16x128xf32>
    %22 = arith.addf %20, %21 : vector<16x128xf32>
    %23 = tpu.iota {dimensions = array<i32: 1>} : vector<16x128xi32>
    %c8_i32 = arith.constant 8 : i32
    %24 = vector.broadcast %c8_i32 : i32 to vector<16x128xi32>
    %25 = arith.cmpi slt, %23, %24 : vector<16x128xi32>
    %cst_18 = arith.constant -1.000000e+30 : f32
    %26 = vector.broadcast %cst_18 : f32 to vector<16x128xf32>
    %27 = arith.select %25, %22, %26 : vector<16x128xi1>, vector<16x128xf32>
    %cst_19 = arith.constant dense<0xFF800000> : vector<16xf32>
    %28 = vector.multi_reduction <maximumf>, %27, %cst_19 [1] : vector<16x128xf32> to vector<16xf32>
    %29 = vector.shape_cast %28 : vector<16xf32> to vector<16x1xf32>
    %30 = vector.broadcast %29 : vector<16x1xf32> to vector<16x128xf32>
    %31 = arith.subf %27, %30 : vector<16x128xf32>
    %32 = math.exp %31 : vector<16x128xf32>
    %cst_20 = arith.constant dense<0.000000e+00> : vector<16xf32>
    %33 = vector.multi_reduction <add>, %32, %cst_20 [1] : vector<16x128xf32> to vector<16xf32>
    %34 = vector.shape_cast %33 : vector<16xf32> to vector<16x1xf32>
    %35 = math.log %34 : vector<16x1xf32>
    %36 = arith.addf %35, %29 : vector<16x1xf32>
    %37 = vector.broadcast %36 : vector<16x1xf32> to vector<16x128xf32>
    %38 = arith.subf %27, %37 : vector<16x128xf32>
    %c0_21 = arith.constant 0 : index
    %c0_22 = arith.constant 0 : index
    %39 = vector.load %arg4[%c0_21, %c0_22] : memref<16x128xf32, #tpu.memory_space<vmem>>, vector<16x128xf32>
    %40 = arith.mulf %39, %38 : vector<16x128xf32>
    %41 = vector.shape_cast %40 : vector<16x128xf32> to vector<1x16x128xf32>
    %cst_23 = arith.constant dense<0.000000e+00> : vector<1xf32>
    %42 = vector.multi_reduction <add>, %41, %cst_23 [1, 2] : vector<1x16x128xf32> to vector<1xf32>
    %43 = vector.shape_cast %42 : vector<1xf32> to vector<1x1x1xf32>
    %44 = vector.extract %43[0, 0, 0] : f32 from vector<1x1x1xf32>
    %cst_24 = arith.constant 0.000000e+00 : f32
    %45 = arith.subf %cst_24, %44 : f32
    %46 = vector.shape_cast %39 : vector<16x128xf32> to vector<1x16x128xf32>
    %cst_25 = arith.constant dense<0.000000e+00> : vector<1xf32>
    %47 = vector.multi_reduction <add>, %46, %cst_25 [1, 2] : vector<1x16x128xf32> to vector<1xf32>
    %48 = vector.shape_cast %47 : vector<1xf32> to vector<1x1x1xf32>
    %49 = vector.extract %48[0, 0, 0] : f32 from vector<1x1x1xf32>
    %cst_26 = arith.constant 1.000000e+00 : f32
    %50 = arith.maximumf %49, %cst_26 : f32
    %51 = arith.divf %45, %50 : f32
    %cst_27 = arith.constant 0.000000e+00 : f32
    %52 = vector.broadcast %cst_27 : f32 to vector<1x128xf32>
    %53 = vector.broadcast %51 : f32 to vector<1x128xf32>
    %54 = arith.addf %52, %53 : vector<1x128xf32>
    %c0_28 = arith.constant 0 : index
    %c0_29 = arith.constant 0 : index
    %55 = vector.load %arg5[%c0_28, %c0_29] : memref<1x128xf32, #tpu.memory_space<vmem>>, vector<1x128xf32>
    tpu.vector_store %arg5[%c0_28, %c0_29], %54 {strides = array<i32>} : memref<1x128xf32, #tpu.memory_space<vmem>>, vector<1x128xf32>,
    return
  }
}

</mosaic_0001>

<llo_original>
// kernel: tpu_custom_call.1
$region0: #{tpu_custom_call.1}
  #allocation0 [shape = 'u32[]', space=smem, size = 0x4, offset = 0x4, fixed_abs, tag = 'smem constant byte address 0x4 - core index']
  #allocation1 [shape = 'u32[72,128]{1,0:T(1,128)}', space=vmem, size = 0x9000, scoped, tag = 'internal scratch']
  %s0 = inlined_call_operand.hbm [shape: bf16[16,16], index: 0, kind: input, shape index: {}]
  %s1 = inlined_call_operand.hbm [shape: bf16[16,128], index: 1, kind: input, shape index: {}]
  %s2 = inlined_call_operand.hbm [shape: bf16[2,128,128], index: 2, kind: input, shape index: {}]
  %s3 = inlined_call_operand.vmem [shape: f32[2,1,128], index: 3, kind: input, shape index: {}]
  %s4 = inlined_call_operand.hbm [shape: f32[16,128], index: 4, kind: input, shape index: {}]
  %s5 = inlined_call_operand.hbm [shape: f32[1,128], index: 5, kind: output, shape index: {}]
  %s6 = sld [smem:[#allocation0]]
  $region46: #{tpu_custom_call.1} parent=0
    _
  %s8 = ssub.s32 1, %s6
  %s9 = scalar_select 0, %s8, %s6
  $region1: #{tpu_custom_call.1} parent=0
    #allocation2 [shape = 'u8[4096]{0}', space=vmem, size = 0x1000, scoped, tag = 'input window, operand 0, single buffered']
    #allocation3 [shape = 's32[1]{0}', space=sflag, size = 0x4, scoped, tag = 'scoped memory for tpu_custom_call.1']
    #allocation4 [shape = 's32[1]{0}', space=sflag, size = 0x4, scoped, tag = 'scoped memory for tpu_custom_call.1']
    #allocation5 [shape = 'u8[4096]{0}', space=vmem, size = 0x1000, scoped, tag = 'input window, operand 1, single buffered']
    #allocation6 [shape = 's32[1]{0}', space=sflag, size = 0x4, scoped, tag = 'scoped memory for tpu_custom_call.1']
    #allocation7 [shape = 'u8[65536]{0}', space=vmem, size = 0x10000, scoped, tag = 'input window, operand 2, single buffered']
    #allocation8 [shape = 'u8[8192]{0}', space=vmem, size = 0x2000, scoped, tag = 'input window, operand 4, single buffered']
    #allocation9 [shape = 's32[1]{0}', space=sflag, size = 0x4, scoped, tag = 'scoped memory for tpu_custom_call.1']
    #allocation10 [shape = 'u8[512]{0}', space=vmem, size = 0x400, scoped, tag = 'output window, operand 0, single buffered']
    %10 = vsyncpa [#allocation3], 0
    %11 = vsyncpa [#allocation6], 0
    %12 = vsyncpa [#allocation9], 0
    %13 = vsyncpa [#allocation4], 0
    // Predicated region
    $region2: #{tpu_custom_call.1} parent=1 // pred_check
      _
    $region3: #{tpu_custom_call.1} parent=1 // pred_check_branch
      %15 = sbr.rel (0) target = $region5
    $region4: #{tpu_custom_call.1} parent=1 // pred_region
      %17 = vsyncadd [#allocation3], 0
      %s18 = sshll.u32 %s0, 4
      %s19 = int_to_ptr.hbm [resolvable:$true] %s18
      %s20 = sshll.u32 [#allocation2], 4
      %s21 = int_to_ptr.vmem [resolvable:$true] %s20
      %26 = dma.hbm_to_vmem [thread:$0]  %s19, 128, %s21, [#allocation3], 64, 64, 4
    $region5: #{tpu_custom_call.1} parent=1 // pred_fallthru
      _
    // Predicated region
    $region6: #{tpu_custom_call.1} parent=1 // pred_check
      _
    $region7: #{tpu_custom_call.1} parent=1 // pred_check_branch
      %28 = sbr.rel (0) target = $region9
    $region8: #{tpu_custom_call.1} parent=1 // pred_region
      %30 = vsyncadd [#allocation6], 0
      %s31 = sshll.u32 %s1, 4
      %s32 = int_to_ptr.hbm [resolvable:$true] %s31
      %s33 = sshll.u32 [#allocation5], 4
      %s34 = int_to_ptr.vmem [resolvable:$true] %s33
      %39 = dma.hbm_to_vmem [thread:$0]  %s32, 128, %s34, [#allocation6], 64, 64, 4
    $region9: #{tpu_custom_call.1} parent=1 // pred_fallthru
      _
    // Predicated region
    $region10: #{tpu_custom_call.1} parent=1 // pred_check
      _
    $region11: #{tpu_custom_call.1} parent=1 // pred_check_branch
      %41 = sbr.rel (0) target = $region13
    $region12: #{tpu_custom_call.1} parent=1 // pred_region
      %43 = vsyncadd [#allocation6], 0
      %s44 = sshll.u32 %s2, 4
      %s45 = int_to_ptr.hbm [resolvable:$true] %s44
      %s46 = sshll.u32 [#allocation7], 4
      %s47 = int_to_ptr.vmem [resolvable:$true] %s46
      %52 = dma.hbm_to_vmem [thread:$0]  %s45, 2048, %s47, [#allocation6], 64, 64, 4
    $region13: #{tpu_custom_call.1} parent=1 // pred_fallthru
      _
    // Predicated region
    $region14: #{tpu_custom_call.1} parent=1 // pred_check
      _
    $region15: #{tpu_custom_call.1} parent=1 // pred_check_branch
      %54 = sbr.rel (0) target = $region17
    $region16: #{tpu_custom_call.1} parent=1 // pred_region
      _
    $region17: #{tpu_custom_call.1} parent=1 // pred_fallthru
      _
    // Predicated region
    $region18: #{tpu_custom_call.1} parent=1 // pred_check
      _
    $region19: #{tpu_custom_call.1} parent=1 // pred_check_branch
      %56 = sbr.rel (0) target = $region21
    $region20: #{tpu_custom_call.1} parent=1 // pred_region
      %58 = vsyncadd [#allocation9], 0
      %s59 = sshll.u32 %s4, 4
      %s60 = int_to_ptr.hbm [resolvable:$true] %s59
      %s61 = sshll.u32 [#allocation8], 4
      %s62 = int_to_ptr.vmem [resolvable:$true] %s61
      %67 = dma.hbm_to_vmem [thread:$0]  %s60, 256, %s62, [#allocation9], 128, 128, 8
    $region21: #{tpu_custom_call.1} parent=1 // pred_fallthru
      _
    // Predicated region
    $region22: #{tpu_custom_call.1} parent=1 // pred_check
      _
    $region23: #{tpu_custom_call.1} parent=1 // pred_check_branch
      %69 = sbr.rel (0) target = $region25
    $region24: #{tpu_custom_call.1} parent=1 // pred_region
      %71 = dma.done [#allocation3], 128
    $region25: #{tpu_custom_call.1} parent=1 // pred_fallthru
      _
    // Predicated region
    $region26: #{tpu_custom_call.1} parent=1 // pred_check
      _
    $region27: #{tpu_custom_call.1} parent=1 // pred_check_branch
      %73 = sbr.rel (0) target = $region29
    $region28: #{tpu_custom_call.1} parent=1 // pred_region
      %75 = dma.done [#allocation6], 128
    $region29: #{tpu_custom_call.1} parent=1 // pred_fallthru
      _
    // Predicated region
    $region30: #{tpu_custom_call.1} parent=1 // pred_check
      _
    $region31: #{tpu_custom_call.1} parent=1 // pred_check_branch
      %77 = sbr.rel (0) target = $region33
    $region32: #{tpu_custom_call.1} parent=1 // pred_region
      %79 = dma.done [#allocation6], 2048
    $region33: #{tpu_custom_call.1} parent=1 // pred_fallthru
      _
    // Predicated region
    $region34: #{tpu_custom_call.1} parent=1 // pred_check
      _
    $region35: #{tpu_custom_call.1} parent=1 // pred_check_branch
      %81 = sbr.rel (0) target = $region37
    $region36: #{tpu_custom_call.1} parent=1 // pred_region
      %83 = dma.done [#allocation9], 256
    $region37: #{tpu_custom_call.1} parent=1 // pred_fallthru
      _
    %v85 = vld [vmem:[#allocation2] sm:$0xf]
    %v86 = vld [vmem:[#allocation2 + $0x4] sm:$0xf]
    %v87 = vld [vmem:[#allocation5] sm:$0xf]
    %v88 = vld [vmem:[#allocation5 + $0x4] sm:$0xf]
    %v89 = vld [vmem:[#allocation7] sm:$0xf]
    %v90 = vld [vmem:[#allocation7 + $0x4] sm:$0xf]
    %v91 = vld [vmem:[#allocation7 + $0x8] sm:$0xf]
    %v92 = vld [vmem:[#allocation7 + $0xc] sm:$0xf]
    %v93 = vld [vmem:[#allocation7 + $0x10] sm:$0xf]
    %v94 = vld [vmem:[#allocation7 + $0x14] sm:$0xf]
    %v95 = vld [vmem:[#allocation7 + $0x18] sm:$0xf]
    %v96 = vld [vmem:[#allocation7 + $0x1c] sm:$0xf]
    %v97 = vld [vmem:[#allocation7 + $0x20] sm:$0xf]
    %v98 = vld [vmem:[#allocation7 + $0x24] sm:$0xf]
    %v99 = vld [vmem:[#allocation7 + $0x28] sm:$0xf]
    %v100 = vld [vmem:[#allocation7 + $0x2c] sm:$0xf]
    %v101 = vld [vmem:[#allocation7 + $0x30] sm:$0xf]
    %v102 = vld [vmem:[#allocation7 + $0x34] sm:$0xf]
    %v103 = vld [vmem:[#allocation7 + $0x38] sm:$0xf]
    %v104 = vld [vmem:[#allocation7 + $0x3c] sm:$0xf]
    %v105 = vld [vmem:[%s3] sm:$0x1]
    %v108 = vunpack.c.l.b16 %v87
    %v109 = vunpack.c.l.b16 %v88
    %v110 = vpack.c.b16 %v109, %v108
    %v128 = vunpack.c.l.b16 %v89
    %v129 = vunpack.c.l.b16 %v90
    %v130 = vunpack.c.l.b16 %v91
    %v131 = vunpack.c.l.b16 %v92
    %v132 = vunpack.c.l.b16 %v93
    %v133 = vunpack.c.l.b16 %v94
    %v134 = vunpack.c.l.b16 %v95
    %v135 = vunpack.c.l.b16 %v96
    %v136 = vunpack.c.l.b16 %v97
    %v137 = vunpack.c.l.b16 %v98
    %v138 = vunpack.c.l.b16 %v99
    %v139 = vunpack.c.l.b16 %v100
    %v140 = vunpack.c.l.b16 %v101
    %v141 = vunpack.c.l.b16 %v102
    %v142 = vunpack.c.l.b16 %v103
    %v143 = vunpack.c.l.b16 %v104
    %v144 = vpack.c.b16 %v129, %v128
    %v145 = vpack.c.b16 %v131, %v130
    %v146 = vpack.c.b16 %v133, %v132
    %v147 = vpack.c.b16 %v135, %v134
    %v148 = vpack.c.b16 %v137, %v136
    %v149 = vpack.c.b16 %v139, %v138
    %v150 = vpack.c.b16 %v141, %v140
    %v151 = vpack.c.b16 %v143, %v142
    %160 = vmatpush.bf16.msra.mxu0 %v151
    %161 = vmatpush.bf16.msra.mxu0 %v150
    %162 = vmatpush.bf16.msra.mxu0 %v149
    %163 = vmatpush.bf16.msra.mxu0 %v148
    %164 = vmatpush.bf16.msra.mxu0 %v147
    %165 = vmatpush.bf16.msra.mxu0 %v146
    %166 = vmatpush.bf16.msra.mxu0 %v145
    %167 = vmatpush.bf16.msra.mxu0 %v144
    %168 = vmatmul.bf16.gmra.mxu0 %v110
    %v169 = vpop.f32.mrf.mxu0
    %v170 = vadd.f32 0.0, %v169
    %v171 = vpop.f32.mrf.mxu0
    %v172 = vadd.f32 0.0, %v171
    %173 = vdwg.mxu0
    %v174 = vpack.c.bf16 %v172, %v170
    %v176 = vperm.slane %v105, 0
    %v180 = vunpack.c.l.b16 %v85
    %v181 = vunpack.c.l.b16 %v86
    %v182 = vpack.c.b16 %v181, %v180
    %vm183 = vcmask 130048
    %v185 = vsel %vm183, %v182, 0
    %187 = vmatpush.bf16.msra.mxu0 0
    %188 = vmatpush.bf16.msra.mxu0 0
    %189 = vmatpush.bf16.msra.mxu0 0
    %190 = vmatpush.bf16.msra.mxu0 0
    %191 = vmatpush.bf16.msra.mxu0 0
    %192 = vmatpush.bf16.msra.mxu0 0
    %193 = vmatpush.bf16.msra.mxu0 0
    %194 = vmatpush.bf16.msra.mxu0 %v174
    %195 = vmatmul.bf16.gmra.mxu0 %v185
    %v196 = vpop.f32.mrf.mxu0
    %v197 = vadd.f32 %v176, %v196
    %v198 = vpop.f32.mrf.mxu0
    %v199 = vadd.f32 %v176, %v198
    %200 = vdwg.mxu0
    %v201 = vmax.f32 %v197, 0.0
    %v202 = vmax.f32 %v199, 0.0
    %v203 = vpack.c.bf16 %v202, %v201
    %s204 = scalar_lea.vmem [#allocation7], 64
    %v205 = vld [vmem:[%s204] sm:$0xf]
    %v206 = vld [vmem:[%s204 + $0x4] sm:$0xf]
    %v207 = vld [vmem:[%s204 + $0x8] sm:$0xf]
    %v208 = vld [vmem:[%s204 + $0xc] sm:$0xf]
    %v209 = vld [vmem:[%s204 + $0x10] sm:$0xf]
    %v210 = vld [vmem:[%s204 + $0x14] sm:$0xf]
    %v211 = vld [vmem:[%s204 + $0x18] sm:$0xf]
    %v212 = vld [vmem:[%s204 + $0x1c] sm:$0xf]
    %v213 = vld [vmem:[%s204 + $0x20] sm:$0xf]
    %v214 = vld [vmem:[%s204 + $0x24] sm:$0xf]
    %v215 = vld [vmem:[%s204 + $0x28] sm:$0xf]
    %v216 = vld [vmem:[%s204 + $0x2c] sm:$0xf]
    %v217 = vld [vmem:[%s204 + $0x30] sm:$0xf]
    %v218 = vld [vmem:[%s204 + $0x34] sm:$0xf]
    %v219 = vld [vmem:[%s204 + $0x38] sm:$0xf]
    %v220 = vld [vmem:[%s204 + $0x3c] sm:$0xf]
    %s221 = scalar_lea.vmem %s3, 1
    %v222 = vld [vmem:[%s221] sm:$0x1]
    %v239 = vunpack.c.l.b16 %v205
    %v240 = vunpack.c.l.b16 %v206
    %v241 = vunpack.c.l.b16 %v207
    %v242 = vunpack.c.l.b16 %v208
    %v243 = vunpack.c.l.b16 %v209
    %v244 = vunpack.c.l.b16 %v210
    %v245 = vunpack.c.l.b16 %v211
    %v246 = vunpack.c.l.b16 %v212
    %v247 = vunpack.c.l.b16 %v213
    %v248 = vunpack.c.l.b16 %v214
    %v249 = vunpack.c.l.b16 %v215
    %v250 = vunpack.c.l.b16 %v216
    %v251 = vunpack.c.l.b16 %v217
    %v252 = vunpack.c.l.b16 %v218
    %v253 = vunpack.c.l.b16 %v219
    %v254 = vunpack.c.l.b16 %v220
    %v255 = vpack.c.b16 %v240, %v239
    %v256 = vpack.c.b16 %v242, %v241
    %v257 = vpack.c.b16 %v244, %v243
    %v258 = vpack.c.b16 %v246, %v245
    %v259 = vpack.c.b16 %v248, %v247
    %v260 = vpack.c.b16 %v250, %v249
    %v261 = vpack.c.b16 %v252, %v251
    %v262 = vpack.c.b16 %v254, %v253
    %271 = vmatpush.bf16.msra.mxu0 %v262
    %272 = vmatpush.bf16.msra.mxu0 %v261
    %273 = vmatpush.bf16.msra.mxu0 %v260
    %274 = vmatpush.bf16.msra.mxu0 %v259
    %275 = vmatpush.bf16.msra.mxu0 %v258
    %276 = vmatpush.bf16.msra.mxu0 %v257
    %277 = vmatpush.bf16.msra.mxu0 %v256
    %278 = vmatpush.bf16.msra.mxu0 %v255
    %279 = vmatmul.bf16.gmra.mxu0 %v203
    %v280 = vpop.f32.mrf.mxu0
    %v281 = vadd.f32 0.0, %v280
    %v282 = vpop.f32.mrf.mxu0
    %v283 = vadd.f32 0.0, %v282
    %284 = vdwg.mxu0
    %v285 = vpack.c.bf16 %v283, %v281
    %v287 = vperm.slane %v222, 0
    %289 = vmatpush.bf16.msra.mxu0 0
    %290 = vmatpush.bf16.msra.mxu0 0
    %291 = vmatpush.bf16.msra.mxu0 0
    %292 = vmatpush.bf16.msra.mxu0 0
    %293 = vmatpush.bf16.msra.mxu0 0
    %294 = vmatpush.bf16.msra.mxu0 0
    %295 = vmatpush.bf16.msra.mxu0 0
    %296 = vmatpush.bf16.msra.mxu0 %v285
    %297 = vmatmul.bf16.gmra.mxu0 %v185
    %v298 = vpop.f32.mrf.mxu0
    %v299 = vadd.f32 %v287, %v298
    %v300 = vpop.f32.mrf.mxu0
    %v301 = vadd.f32 %v287, %v300
    %302 = vdwg.mxu0
    %v303 = vlaneseq
    %v304 = vand.u32 %v303, 127
    %vm305 = vcmp.lt.s32.totalorder %v304, 8
    %v306 = vsel %vm305, %v299, -1e+30
    %v307 = vsel %vm305, %v301, -1e+30
    %308 = vmax.xlane.f32.xlu0 %v306
    %v309 = vpop.xlane.xlu0 %308
    %310 = vmax.xlane.f32.xlu0 %v307
    %v311 = vpop.xlane.xlu0 %310
    %v312 = vsub.f32 %v306, %v309
    %v313 = vsub.f32 %v307, %v311
    %v314 = vmul.f32 %v312, 1.442695
    %v315 = vpow.pop %v314
    %v316 = vmul.f32 %v313, 1.442695
    %v317 = vpow.pop %v316
    %318 = vadd.xlane.f32.xlu0 %v315
    %v319 = vpop.xlane.xlu0 %318
    %320 = vadd.xlane.f32.xlu0 %v317
    %v321 = vpop.xlane.xlu0 %320
    %v322 = vlog2.pop %v319
    %v323 = vmul.f32 %v322, 0.6931472
    %v324 = vlog2.pop %v321
    %v325 = vmul.f32 %v324, 0.6931472
    %v326 = vadd.f32 %v323, %v309
    %v327 = vadd.f32 %v325, %v311
    %v328 = vsub.f32 %v306, %v326
    %v329 = vsub.f32 %v307, %v327
    %v330 = vld [vmem:[#allocation8] sm:$0xff]
    %v331 = vld [vmem:[#allocation8 + $0x8] sm:$0xff]
    %v332 = vmul.f32 %v330, %v328
    %v333 = vmul.f32 %v331, %v329
    %v334 = vadd.f32 %v332, %v333
    %335 = vadd.xlane.f32.xlu0 %v334
    %v336 = vpop.xlane.xlu0 %335
    %v337 = vrot.slane %v336, 4
    %v338 = vadd.f32 %v336, %v337
    %v339 = vrot.slane %v338, 2
    %v340 = vadd.f32 %v338, %v339
    %v341 = vrot.slane %v340, 1
    %v342 = vadd.f32 %v340, %v341
    %s343 = vtos %v342
    %s344 = ssub.f32 0.0, %s343
    %v345 = vadd.f32 %v330, %v331
    %346 = vadd.xlane.f32.xlu0 %v345
    %v347 = vpop.xlane.xlu0 %346
    %v348 = vrot.slane %v347, 4
    %v349 = vadd.f32 %v347, %v348
    %v350 = vrot.slane %v349, 2
    %v351 = vadd.f32 %v349, %v350
    %v352 = vrot.slane %v351, 1
    %v353 = vadd.f32 %v351, %v352
    %s354 = vtos %v353
    %s355 = smax.f32 %s354, 1.0
    %v356 = vstv %s355
    %v357 = vrcp.pop %v356
    %v358 = vmul.f32 %v356, %v357
    %v359 = vsub.f32 1.0, %v358
    %v360 = vmul.f32 %v357, %v359
    %v361 = vadd.f32 %v357, %v360
    %vm362 = vweird.f32 %v356
    %vm363 = vweird.f32 %v357
    %vm364 = vmor %vm362, %vm363
    %v365 = vsel %vm364, %v357, %v361
    %v366 = vand.u32 2147483647, %v356
    %vm367 = vcmp.eq.f32.partialorder %v366, 8.507059e+37
    %v368 = vand.u32 %v356, 2147483648
    %v369 = vor.u32 1.1754944e-38, %v368
    %v370 = vsel %vm367, %v369, %v365
    %s371 = vtos %v370
    %s372 = smul.f32 %s344, %s371
    %v373 = vstv %s372
    %v374 = vadd.f32 %v373, 0.0
    %375 = vst [vmem:[#allocation10] sm:$0x1] %v374
    // Predicated region
    $region38: #{tpu_custom_call.1} parent=1 // pred_check
      _
    $region39: #{tpu_custom_call.1} parent=1 // pred_check_branch
      %377 = sbr.rel (0) target = $region41
    $region40: #{tpu_custom_call.1} parent=1 // pred_region
      %379 = vsyncadd [#allocation4], 0
      %s381 = sshll.u32 [#allocation10], 4
      %s382 = int_to_ptr.vmem [resolvable:$true] %s381
      %s383 = sshll.u32 %s5, 4
      %s384 = int_to_ptr.hbm [resolvable:$true] %s383
      %386 = dma.vmem_to_hbm [thread:$0]  %s382, 16, %s384, [#allocation4]
    $region41: #{tpu_custom_call.1} parent=1 // pred_fallthru
      _
    // Predicated region
    $region42: #{tpu_custom_call.1} parent=1 // pred_check
      _
    $region43: #{tpu_custom_call.1} parent=1 // pred_check_branch
      %388 = sbr.rel (0) target = $region45
    $region44: #{tpu_custom_call.1} parent=1 // pred_region
      %390 = dma.done [#allocation4], 16
    $region45: #{tpu_custom_call.1} parent=1 // pred_fallthru
      _
    %391 = vsyncpa [#allocation3], 1
    %392 = vsyncpa [#allocation6], 1
    %393 = vsyncpa [#allocation9], 1
    %394 = vsyncpa [#allocation4], 1

</llo_original>
